<compile_context>
chip_gen: v6e
topology: v6e:2x2x1
jax: 0.10.0
libtpu: 0.0.40
codegen_flags: <defaults>
</compile_context>

<pallas_src>
import jax
import jax.numpy as jnp
from jax import lax
from jax.experimental import pallas as pl
from jax.experimental.pallas import tpu as pltpu

# ---- model hyper-parameters (module __init__ + D_MODEL constant) ------------
INPUT_DIM = 16
HIDDEN_DIM = 32
OUTPUT_DIM = 32
HEADS = 2
D_MODEL = 64
NEG_SLOPE = 0.2   # PyG GATConv default negative_slope
MASK_NEG = 1e30   # additive mask; stays f32 (do NOT move to bf16/fp16)

# ---- parameter-slab layout (rows 8-aligned, 128 lanes, f32) ------------------
SLAB_LANES = 128
R_W1AUG = 0     # (16, 66)  = [w1_h0 | w1_h1 | vdst1_h0 | vdst1_h1]
R_VSRC1 = 16    # (2, 16)   pre-composed per-head src attention vectors
R_B1 = 24       # (1, 64)
R_W2AUG = 32    # (64, 33)  = [w2 | vdst2]
R_VSRC2 = 96    # (1, 64)   pre-composed layer-2 src attention vector
R_B2 = 104      # (1, 32)
R_WP = 112      # (32, 64)
R_BP = 144      # (1, 64)
SLAB_ROWS = 152


def _leaky_relu(x):
    return jnp.where(x > 0, x, NEG_SLOPE * x)


def _elu(x):
    return jnp.where(x > 0, x, jnp.exp(x) - 1.0)


def graph_encoder_kernel(x_ref, bias_ref, p_ref, out_ref):
    bf16 = jnp.bfloat16
    xb = x_ref[...].astype(bf16)                      # (N, 16)
    bias = bias_ref[...]                              # (N, N) f32 additive mask

    def attend(dst_col, src_row, h_bf16):
        # dst_col: (N,1) f32 target terms; src_row: (1,N) f32 source terms
        e = _leaky_relu(dst_col + src_row) + bias     # (N, N) f32
        e = e - jnp.max(e, axis=1, keepdims=True)
        p = jnp.exp(e)
        p = p / jnp.sum(p, axis=1, keepdims=True)     # exact normalization
        return jnp.dot(p.astype(bf16), h_bf16, preferred_element_type=jnp.float32)

    # ---- GAT layer 1 (heads=HEADS, concat=True) -----------------------------
    w1aug = p_ref[R_W1AUG:R_W1AUG + INPUT_DIM, 0:HEADS * HIDDEN_DIM + HEADS].astype(bf16)
    h1aug = jnp.dot(xb, w1aug, preferred_element_type=jnp.float32)      # (N, 66)
    vsrc1 = p_ref[R_VSRC1:R_VSRC1 + HEADS, 0:INPUT_DIM].astype(bf16)    # (2, 16)
    src_rows = lax.dot_general(vsrc1, xb, (((1,), (1,)), ((), ())),
                               preferred_element_type=jnp.float32)      # (2, N)

    dlo = HEADS * HIDDEN_DIM                                            # 64
    o0 = attend(h1aug[:, dlo:dlo + 1], src_rows[0:1, :],
                h1aug[:, 0:HIDDEN_DIM].astype(bf16))
    o1 = attend(h1aug[:, dlo + 1:dlo + 2], src_rows[1:2, :],
                h1aug[:, HIDDEN_DIM:2 * HIDDEN_DIM].astype(bf16))
    b1 = p_ref[R_B1:R_B1 + 1, 0:HEADS * HIDDEN_DIM]                     # (1, 64)
    x1 = _elu(jnp.concatenate([o0, o1], axis=1) + b1)                   # (N, 64) f32
    x1b = x1.astype(bf16)

    # ---- GAT layer 2 (heads=1) ----------------------------------------------
    w2aug = p_ref[R_W2AUG:R_W2AUG + HEADS * HIDDEN_DIM, 0:OUTPUT_DIM + 1].astype(bf16)
    h2aug = jnp.dot(x1b, w2aug, preferred_element_type=jnp.float32)     # (N, 33)
    vsrc2 = p_ref[R_VSRC2:R_VSRC2 + 1, 0:HEADS * HIDDEN_DIM].astype(bf16)
    src2 = lax.dot_general(vsrc2, x1b, (((1,), (1,)), ((), ())),
                           preferred_element_type=jnp.float32)          # (1, N)
    x2 = attend(h2aug[:, OUTPUT_DIM:OUTPUT_DIM + 1], src2,
                h2aug[:, 0:OUTPUT_DIM].astype(bf16))
    x2 = x2 + p_ref[R_B2:R_B2 + 1, 0:OUTPUT_DIM]                        # (N, 32)

    # ---- projection: nn.Linear(OUTPUT_DIM, D_MODEL) --------------------------
    wp = p_ref[R_WP:R_WP + OUTPUT_DIM, 0:D_MODEL].astype(bf16)          # (32, 64)
    out_ref[...] = (jnp.dot(x2.astype(bf16), wp, preferred_element_type=jnp.float32)
                    + p_ref[R_BP:R_BP + 1, 0:D_MODEL])


def init_params(key):
    """Parameters in the 'PyTorch-like' layout."""
    ks = jax.random.split(key, 8)
    scale = 0.1
    w1 = scale * jax.random.normal(ks[0], (INPUT_DIM, HEADS * HIDDEN_DIM), jnp.float32)
    asrc1 = scale * jax.random.normal(ks[1], (HEADS, HIDDEN_DIM), jnp.float32)
    adst1 = scale * jax.random.normal(ks[2], (HEADS, HIDDEN_DIM), jnp.float32)
    b1 = jnp.zeros((1, HEADS * HIDDEN_DIM), jnp.float32)
    w2 = scale * jax.random.normal(ks[3], (HEADS * HIDDEN_DIM, OUTPUT_DIM), jnp.float32)
    asrc2 = scale * jax.random.normal(ks[4], (1, OUTPUT_DIM), jnp.float32)
    adst2 = scale * jax.random.normal(ks[5], (1, OUTPUT_DIM), jnp.float32)
    b2 = jnp.zeros((1, OUTPUT_DIM), jnp.float32)
    wp = scale * jax.random.normal(ks[6], (OUTPUT_DIM, D_MODEL), jnp.float32)
    bp = scale * jax.random.normal(ks[7], (1, D_MODEL), jnp.float32)
    return (w1, asrc1, adst1, b1, w2, asrc2, adst2, b2, wp, bp)


def prepare_params(params):
    """Host-side re-layout: pre-compose attention vectors with the layer weights
    (W @ a), fuse them as extra weight columns, and pack everything into one
    f32 slab so the kernel needs a single parameter DMA."""
    (w1, asrc1, adst1, b1, w2, asrc2, adst2, b2, wp, bp) = params
    w1_heads = [w1[:, hd * HIDDEN_DIM:(hd + 1) * HIDDEN_DIM] for hd in range(HEADS)]
    vdst1 = jnp.stack([w1_heads[hd] @ adst1[hd] for hd in range(HEADS)], axis=1)  # (16, 2)
    vsrc1 = jnp.stack([w1_heads[hd] @ asrc1[hd] for hd in range(HEADS)], axis=0)  # (2, 16)
    w1aug = jnp.concatenate([w1, vdst1], axis=1)                                  # (16, 66)
    vdst2 = (w2 @ adst2[0])[:, None]                                              # (64, 1)
    vsrc2 = (w2 @ asrc2[0])[None, :]                                              # (1, 64)
    w2aug = jnp.concatenate([w2, vdst2], axis=1)                                  # (64, 33)

    slab = jnp.zeros((SLAB_ROWS, SLAB_LANES), jnp.float32)
    slab = slab.at[R_W1AUG:R_W1AUG + INPUT_DIM, 0:HEADS * HIDDEN_DIM + HEADS].set(w1aug)
    slab = slab.at[R_VSRC1:R_VSRC1 + HEADS, 0:INPUT_DIM].set(vsrc1)
    slab = slab.at[R_B1:R_B1 + 1, 0:HEADS * HIDDEN_DIM].set(b1)
    slab = slab.at[R_W2AUG:R_W2AUG + HEADS * HIDDEN_DIM, 0:OUTPUT_DIM + 1].set(w2aug)
    slab = slab.at[R_VSRC2:R_VSRC2 + 1, 0:HEADS * HIDDEN_DIM].set(vsrc2)
    slab = slab.at[R_B2:R_B2 + 1, 0:OUTPUT_DIM].set(b2)
    slab = slab.at[R_WP:R_WP + OUTPUT_DIM, 0:D_MODEL].set(wp)
    slab = slab.at[R_BP:R_BP + 1, 0:D_MODEL].set(bp)
    return slab


def _cost_estimate(n):
    flops = 2 * n * (INPUT_DIM * (HEADS * HIDDEN_DIM + HEADS)        # x @ W1aug
                     + HEADS * INPUT_DIM                             # layer-1 src logits
                     + HEADS * n * HIDDEN_DIM                        # layer-1 p @ h
                     + (HEADS * HIDDEN_DIM) * (OUTPUT_DIM + 1)       # x1 @ W2aug
                     + HEADS * HIDDEN_DIM                            # layer-2 src logits
                     + n * OUTPUT_DIM                                # layer-2 p @ h2
                     + OUTPUT_DIM * D_MODEL)                         # projection
    transcendentals = (HEADS + 1) * n * n + n * HEADS * HIDDEN_DIM   # softmax exp + elu
    bytes_accessed = 4 * (n * INPUT_DIM + n * n + SLAB_ROWS * SLAB_LANES + n * D_MODEL)
    return pl.CostEstimate(flops=flops, transcendentals=transcendentals,
                           bytes_accessed=bytes_accessed)


@jax.jit
def _run_kernel(x, attn_bias, slab):
    n = x.shape[0]
    vmem_spec = pl.BlockSpec(memory_space=pltpu.MemorySpace.VMEM)
    return pl.pallas_call(
        graph_encoder_kernel,
        out_shape=jax.ShapeDtypeStruct((n, D_MODEL), jnp.float32),
        in_specs=[vmem_spec, vmem_spec, vmem_spec],
        out_specs=vmem_spec,
        cost_estimate=_cost_estimate(n),
    )(x, attn_bias, slab)


def graph_encoder_forward(x, edge_index, params):
    """Mirrors GraphEncoder.forward(x, edge_index)."""
    n = x.shape[0]
    e = edge_index.shape[1]
    if e == 0 or n == 0:
        # static-shape early exit, same as the PyTorch guard
        return jnp.zeros((n, D_MODEL), dtype=jnp.float32)
    # Dense adjacency with self-loops (add_self_loops=True default), then the
    # additive softmax bias (adj-1)*1e30 precomputed on the host (small-N path).
    src = edge_index[0]
    dst = edge_index[1]
    adj = jnp.zeros((n, n), jnp.float32).at[dst, src].set(1.0)
    idx = jnp.arange(n)
    adj = adj.at[idx, idx].set(1.0)
    attn_bias = (adj - 1.0) * MASK_NEG
    return _run_kernel(x, attn_bias, prepare_params(params))


# ---- pure-JAX reference (numerical sanity check) -----------------------------
def _reference_forward(x, edge_index, params):
    (w1, asrc1, adst1, b1, w2, asrc2, adst2, b2, wp, bp) = params
    n = x.shape[0]
    src, dst = edge_index[0], edge_index[1]
    adj = jnp.zeros((n, n), jnp.float32).at[dst, src].set(1.0)
    adj = adj.at[jnp.arange(n), jnp.arange(n)].set(1.0)

    def gat_head(h, a_src, a_dst):
        al_src = h @ a_src
        al_dst = h @ a_dst
        raw = al_dst[:, None] + al_src[None, :]
        e = jnp.where(raw > 0, raw, NEG_SLOPE * raw)
        e = jnp.where(adj > 0, e, -jnp.inf)
        p = jax.nn.softmax(e, axis=1)
        return p @ h

    h1 = x @ w1
    outs = [gat_head(h1[:, hd * HIDDEN_DIM:(hd + 1) * HIDDEN_DIM], asrc1[hd], adst1[hd])
            for hd in range(HEADS)]
    x1 = jax.nn.elu(jnp.concatenate(outs, axis=1) + b1)
    h2 = x1 @ w2
    x2 = gat_head(h2, asrc2[0], adst2[0]) + b2
    return x2 @ wp + bp


if __name__ == "__main__":
    key = jax.random.PRNGKey(0)
    k_x, k_p = jax.random.split(key)

    N = 8  # number of graph nodes
    x = jax.random.normal(k_x, (N, INPUT_DIM), jnp.float32)

    # deterministic ring graph (both directions): 16 edges
    fwd_src = jnp.arange(N, dtype=jnp.int32)
    fwd_dst = (fwd_src + 1) % N
    edge_index = jnp.stack([
        jnp.concatenate([fwd_src, fwd_dst]),
        jnp.concatenate([fwd_dst, fwd_src]),
    ], axis=0)  # (2, 16)

    params = init_params(k_p)

    out = graph_encoder_forward(x, edge_index, params)
    out = jax.block_until_ready(out)
    assert out.shape == (N, D_MODEL), out.shape
    assert jnp.all(jnp.isfinite(out))

    ref = _reference_forward(x, edge_index, params)
    # tolerance: bf16 MXU operands (weights / features / softmax weights) vs f32 ref
    assert jnp.allclose(out, ref, rtol=3e-2, atol=2e-2), float(jnp.max(jnp.abs(out - ref)))

    print("KERNEL_OK")
</pallas_src>

<mosaic_0001>
module attributes {stable_mosaic.version = 11 : i64} {
  func.func @graph_encoder_kernel(%arg0: memref<8x16xf32, #tpu.memory_space<vmem>>, %arg1: memref<8x8xf32, #tpu.memory_space<vmem>>, %arg2: memref<152x128xf32, #tpu.memory_space<vmem>>, %arg3: memref<8x64xf32, #tpu.memory_space<vmem>>) attributes {dimension_semantics = [], scalar_prefetch = 0 : i64, scratch_operands = 0 : i64, tpu.core_type = #tpu.core_type<tc>} {
    %c0 = arith.constant 0 : index
    %c0_0 = arith.constant 0 : index
    %0 = vector.load %arg0[%c0, %c0_0] : memref<8x16xf32, #tpu.memory_space<vmem>>, vector<8x16xf32>
    %1 = arith.truncf %0 : vector<8x16xf32> to vector<8x16xbf16>
    %c0_1 = arith.constant 0 : index
    %c0_2 = arith.constant 0 : index
    %2 = vector.load %arg1[%c0_1, %c0_2] : memref<8x8xf32, #tpu.memory_space<vmem>>, vector<8x8xf32>
    %c0_3 = arith.constant 0 : index
    %c0_4 = arith.constant 0 : index
    %3 = vector.load %arg2[%c0_3, %c0_4] : memref<152x128xf32, #tpu.memory_space<vmem>>, vector<16x66xf32>
    %4 = arith.truncf %3 : vector<16x66xf32> to vector<16x66xbf16>
    %cst = arith.constant dense<0.000000e+00> : vector<8x66xf32>
    %5 = tpu.matmul %1, %4, %cst {dimension_numbers = #tpu.dot_dimension_numbers<[1], [0], [0], [1], [0, 0, 1, 1], [], []>} : vector<8x16xbf16>, vector<16x66xbf16>, vector<8x66xf32> -> vector<8x66xf32>
    %c16 = arith.constant 16 : index
    %c0_5 = arith.constant 0 : index
    %6 = vector.load %arg2[%c16, %c0_5] : memref<152x128xf32, #tpu.memory_space<vmem>>, vector<2x16xf32>
    %7 = arith.truncf %6 : vector<2x16xf32> to vector<2x16xbf16>
    %cst_6 = arith.constant dense<0.000000e+00> : vector<2x8xf32>
    %8 = tpu.matmul %7, %1, %cst_6 {dimension_numbers = #tpu.dot_dimension_numbers<[1], [1], [0], [0], [0, 0, 1, 0], [], []>} : vector<2x16xbf16>, vector<8x16xbf16>, vector<2x8xf32> -> vector<2x8xf32>
    %9 = vector.extract_strided_slice %5 {offsets = [0, 64], sizes = [8, 1], strides = [1, 1]} : vector<8x66xf32> to vector<8x1xf32>
    %10 = vector.extract_strided_slice %8 {offsets = [0, 0], sizes = [1, 8], strides = [1, 1]} : vector<2x8xf32> to vector<1x8xf32>
    %11 = vector.extract_strided_slice %5 {offsets = [0, 0], sizes = [8, 32], strides = [1, 1]} : vector<8x66xf32> to vector<8x32xf32>
    %12 = arith.truncf %11 : vector<8x32xf32> to vector<8x32xbf16>
    %13 = vector.broadcast %9 : vector<8x1xf32> to vector<8x8xf32>
    %14 = vector.broadcast %10 : vector<1x8xf32> to vector<8x8xf32>
    %15 = arith.addf %13, %14 : vector<8x8xf32>
    %cst_7 = arith.constant 0.000000e+00 : f32
    %16 = vector.broadcast %cst_7 : f32 to vector<8x8xf32>
    %17 = arith.cmpf ogt, %15, %16 : vector<8x8xf32>
    %cst_8 = arith.constant 2.000000e-01 : f32
    %18 = vector.broadcast %cst_8 : f32 to vector<8x8xf32>
    %19 = arith.mulf %18, %15 : vector<8x8xf32>
    %20 = arith.select %17, %15, %19 : vector<8x8xi1>, vector<8x8xf32>
    %21 = arith.addf %20, %2 : vector<8x8xf32>
    %cst_9 = arith.constant dense<0xFF800000> : vector<8xf32>
    %22 = vector.multi_reduction <maximumf>, %21, %cst_9 [1] : vector<8x8xf32> to vector<8xf32>
    %23 = vector.shape_cast %22 : vector<8xf32> to vector<8x1xf32>
    %24 = vector.broadcast %23 : vector<8x1xf32> to vector<8x8xf32>
    %25 = arith.subf %21, %24 : vector<8x8xf32>
    %26 = math.exp %25 : vector<8x8xf32>
    %cst_10 = arith.constant dense<0.000000e+00> : vector<8xf32>
    %27 = vector.multi_reduction <add>, %26, %cst_10 [1] : vector<8x8xf32> to vector<8xf32>
    %28 = vector.shape_cast %27 : vector<8xf32> to vector<8x1xf32>
    %29 = vector.broadcast %28 : vector<8x1xf32> to vector<8x8xf32>
    %30 = arith.divf %26, %29 : vector<8x8xf32>
    %31 = arith.truncf %30 : vector<8x8xf32> to vector<8x8xbf16>
    %cst_11 = arith.constant dense<0.000000e+00> : vector<8x32xf32>
    %32 = tpu.matmul %31, %12, %cst_11 {dimension_numbers = #tpu.dot_dimension_numbers<[1], [0], [0], [1], [0, 0, 1, 1], [], []>} : vector<8x8xbf16>, vector<8x32xbf16>, vector<8x32xf32> -> vector<8x32xf32>
    %33 = vector.extract_strided_slice %5 {offsets = [0, 65], sizes = [8, 1], strides = [1, 1]} : vector<8x66xf32> to vector<8x1xf32>
    %34 = vector.extract_strided_slice %8 {offsets = [1, 0], sizes = [1, 8], strides = [1, 1]} : vector<2x8xf32> to vector<1x8xf32>
    %35 = vector.extract_strided_slice %5 {offsets = [0, 32], sizes = [8, 32], strides = [1, 1]} : vector<8x66xf32> to vector<8x32xf32>
    %36 = arith.truncf %35 : vector<8x32xf32> to vector<8x32xbf16>
    %37 = vector.broadcast %33 : vector<8x1xf32> to vector<8x8xf32>
    %38 = vector.broadcast %34 : vector<1x8xf32> to vector<8x8xf32>
    %39 = arith.addf %37, %38 : vector<8x8xf32>
    %cst_12 = arith.constant 0.000000e+00 : f32
    %40 = vector.broadcast %cst_12 : f32 to vector<8x8xf32>
    %41 = arith.cmpf ogt, %39, %40 : vector<8x8xf32>
    %cst_13 = arith.constant 2.000000e-01 : f32
    %42 = vector.broadcast %cst_13 : f32 to vector<8x8xf32>
    %43 = arith.mulf %42, %39 : vector<8x8xf32>
    %44 = arith.select %41, %39, %43 : vector<8x8xi1>, vector<8x8xf32>
    %45 = arith.addf %44, %2 : vector<8x8xf32>
    %cst_14 = arith.constant dense<0xFF800000> : vector<8xf32>
    %46 = vector.multi_reduction <maximumf>, %45, %cst_14 [1] : vector<8x8xf32> to vector<8xf32>
    %47 = vector.shape_cast %46 : vector<8xf32> to vector<8x1xf32>
    %48 = vector.broadcast %47 : vector<8x1xf32> to vector<8x8xf32>
    %49 = arith.subf %45, %48 : vector<8x8xf32>
    %50 = math.exp %49 : vector<8x8xf32>
    %cst_15 = arith.constant dense<0.000000e+00> : vector<8xf32>
    %51 = vector.multi_reduction <add>, %50, %cst_15 [1] : vector<8x8xf32> to vector<8xf32>
    %52 = vector.shape_cast %51 : vector<8xf32> to vector<8x1xf32>
    %53 = vector.broadcast %52 : vector<8x1xf32> to vector<8x8xf32>
    %54 = arith.divf %50, %53 : vector<8x8xf32>
    %55 = arith.truncf %54 : vector<8x8xf32> to vector<8x8xbf16>
    %cst_16 = arith.constant dense<0.000000e+00> : vector<8x32xf32>
    %56 = tpu.matmul %55, %36, %cst_16 {dimension_numbers = #tpu.dot_dimension_numbers<[1], [0], [0], [1], [0, 0, 1, 1], [], []>} : vector<8x8xbf16>, vector<8x32xbf16>, vector<8x32xf32> -> vector<8x32xf32>
    %c24 = arith.constant 24 : index
    %c0_17 = arith.constant 0 : index
    %57 = vector.load %arg2[%c24, %c0_17] : memref<152x128xf32, #tpu.memory_space<vmem>>, vector<1x64xf32>
    %58 = tpu.concatenate %32, %56 in 1 : vector<8x32xf32>, vector<8x32xf32> -> vector<8x64xf32>
    %59 = vector.broadcast %57 : vector<1x64xf32> to vector<8x64xf32>
    %60 = arith.addf %58, %59 : vector<8x64xf32>
    %cst_18 = arith.constant 0.000000e+00 : f32
    %61 = vector.broadcast %cst_18 : f32 to vector<8x64xf32>
    %62 = arith.cmpf ogt, %60, %61 : vector<8x64xf32>
    %63 = math.exp %60 : vector<8x64xf32>
    %cst_19 = arith.constant 1.000000e+00 : f32
    %64 = vector.broadcast %cst_19 : f32 to vector<8x64xf32>
    %65 = arith.subf %63, %64 : vector<8x64xf32>
    %66 = arith.select %62, %60, %65 : vector<8x64xi1>, vector<8x64xf32>
    %67 = arith.truncf %66 : vector<8x64xf32> to vector<8x64xbf16>
    %c32 = arith.constant 32 : index
    %c0_20 = arith.constant 0 : index
    %68 = vector.load %arg2[%c32, %c0_20] : memref<152x128xf32, #tpu.memory_space<vmem>>, vector<64x33xf32>
    %69 = arith.truncf %68 : vector<64x33xf32> to vector<64x33xbf16>
    %cst_21 = arith.constant dense<0.000000e+00> : vector<8x33xf32>
    %70 = tpu.matmul %67, %69, %cst_21 {dimension_numbers = #tpu.dot_dimension_numbers<[1], [0], [0], [1], [0, 0, 1, 1], [], []>} : vector<8x64xbf16>, vector<64x33xbf16>, vector<8x33xf32> -> vector<8x33xf32>
    %c96 = arith.constant 96 : index
    %c0_22 = arith.constant 0 : index
    %71 = vector.load %arg2[%c96, %c0_22] : memref<152x128xf32, #tpu.memory_space<vmem>>, vector<1x64xf32>
    %72 = arith.truncf %71 : vector<1x64xf32> to vector<1x64xbf16>
    %cst_23 = arith.constant dense<0.000000e+00> : vector<1x8xf32>
    %73 = tpu.matmul %72, %67, %cst_23 {dimension_numbers = #tpu.dot_dimension_numbers<[1], [1], [0], [0], [0, 0, 1, 0], [], []>} : vector<1x64xbf16>, vector<8x64xbf16>, vector<1x8xf32> -> vector<1x8xf32>
    %74 = vector.extract_strided_slice %70 {offsets = [0, 32], sizes = [8, 1], strides = [1, 1]} : vector<8x33xf32> to vector<8x1xf32>
    %75 = vector.extract_strided_slice %70 {offsets = [0, 0], sizes = [8, 32], strides = [1, 1]} : vector<8x33xf32> to vector<8x32xf32>
    %76 = arith.truncf %75 : vector<8x32xf32> to vector<8x32xbf16>
    %77 = vector.broadcast %74 : vector<8x1xf32> to vector<8x8xf32>
    %78 = vector.broadcast %73 : vector<1x8xf32> to vector<8x8xf32>
    %79 = arith.addf %77, %78 : vector<8x8xf32>
    %cst_24 = arith.constant 0.000000e+00 : f32
    %80 = vector.broadcast %cst_24 : f32 to vector<8x8xf32>
    %81 = arith.cmpf ogt, %79, %80 : vector<8x8xf32>
    %cst_25 = arith.constant 2.000000e-01 : f32
    %82 = vector.broadcast %cst_25 : f32 to vector<8x8xf32>
    %83 = arith.mulf %82, %79 : vector<8x8xf32>
    %84 = arith.select %81, %79, %83 : vector<8x8xi1>, vector<8x8xf32>
    %85 = arith.addf %84, %2 : vector<8x8xf32>
    %cst_26 = arith.constant dense<0xFF800000> : vector<8xf32>
    %86 = vector.multi_reduction <maximumf>, %85, %cst_26 [1] : vector<8x8xf32> to vector<8xf32>
    %87 = vector.shape_cast %86 : vector<8xf32> to vector<8x1xf32>
    %88 = vector.broadcast %87 : vector<8x1xf32> to vector<8x8xf32>
    %89 = arith.subf %85, %88 : vector<8x8xf32>
    %90 = math.exp %89 : vector<8x8xf32>
    %cst_27 = arith.constant dense<0.000000e+00> : vector<8xf32>
    %91 = vector.multi_reduction <add>, %90, %cst_27 [1] : vector<8x8xf32> to vector<8xf32>
    %92 = vector.shape_cast %91 : vector<8xf32> to vector<8x1xf32>
    %93 = vector.broadcast %92 : vector<8x1xf32> to vector<8x8xf32>
    %94 = arith.divf %90, %93 : vector<8x8xf32>
    %95 = arith.truncf %94 : vector<8x8xf32> to vector<8x8xbf16>
    %cst_28 = arith.constant dense<0.000000e+00> : vector<8x32xf32>
    %96 = tpu.matmul %95, %76, %cst_28 {dimension_numbers = #tpu.dot_dimension_numbers<[1], [0], [0], [1], [0, 0, 1, 1], [], []>} : vector<8x8xbf16>, vector<8x32xbf16>, vector<8x32xf32> -> vector<8x32xf32>
    %c104 = arith.constant 104 : index
    %c0_29 = arith.constant 0 : index
    %97 = vector.load %arg2[%c104, %c0_29] : memref<152x128xf32, #tpu.memory_space<vmem>>, vector<1x32xf32>
    %98 = vector.broadcast %97 : vector<1x32xf32> to vector<8x32xf32>
    %99 = arith.addf %96, %98 : vector<8x32xf32>
    %c112 = arith.constant 112 : index
    %c0_30 = arith.constant 0 : index
    %100 = vector.load %arg2[%c112, %c0_30] : memref<152x128xf32, #tpu.memory_space<vmem>>, vector<32x64xf32>
    %101 = arith.truncf %100 : vector<32x64xf32> to vector<32x64xbf16>
    %102 = arith.truncf %99 : vector<8x32xf32> to vector<8x32xbf16>
    %cst_31 = arith.constant dense<0.000000e+00> : vector<8x64xf32>
    %103 = tpu.matmul %102, %101, %cst_31 {dimension_numbers = #tpu.dot_dimension_numbers<[1], [0], [0], [1], [0, 0, 1, 1], [], []>} : vector<8x32xbf16>, vector<32x64xbf16>, vector<8x64xf32> -> vector<8x64xf32>
    %c144 = arith.constant 144 : index
    %c0_32 = arith.constant 0 : index
    %104 = vector.load %arg2[%c144, %c0_32] : memref<152x128xf32, #tpu.memory_space<vmem>>, vector<1x64xf32>
    %105 = vector.broadcast %104 : vector<1x64xf32> to vector<8x64xf32>
    %106 = arith.addf %103, %105 : vector<8x64xf32>
    %c0_33 = arith.constant 0 : index
    %c0_34 = arith.constant 0 : index
    %107 = vector.load %arg3[%c0_33, %c0_34] : memref<8x64xf32, #tpu.memory_space<vmem>>, vector<8x64xf32>
    tpu.vector_store %arg3[%c0_33, %c0_34], %106 {strides = array<i32>} : memref<8x64xf32, #tpu.memory_space<vmem>>, vector<8x64xf32>,
    return
  }
}

</mosaic_0001>

<llo_original>
// kernel: _run_kernel.1
$region0: #{_run_kernel.1}
  #allocation0 [shape = 'u32[]', space=smem, size = 0x4, offset = 0x4, fixed_abs, tag = 'smem constant byte address 0x4 - core index']
  #allocation1 [shape = 'u32[144,128]{1,0:T(1,128)}', space=vmem, size = 0x12000, scoped, tag = 'internal scratch']
  %s0 = inlined_call_operand.hbm [shape: f32[8,16], index: 0, kind: input, shape index: {}]
  %s1 = inlined_call_operand.hbm [shape: f32[8,8], index: 1, kind: input, shape index: {}]
  %s2 = inlined_call_operand.hbm [shape: f32[152,128], index: 2, kind: input, shape index: {}]
  %s3 = inlined_call_operand.hbm [shape: f32[8,64], index: 3, kind: output, shape index: {}]
  %s4 = sld [smem:[#allocation0]]
  $region34: #{_run_kernel.1} parent=0
    _
  %s6 = ssub.s32 1, %s4
  %s7 = scalar_select 0, %s6, %s4
  $region1: #{_run_kernel.1} parent=0
    #allocation2 [shape = 'u8[4096]{0}', space=vmem, size = 0x1000, scoped, tag = 'input window, operand 0, single buffered']
    #allocation3 [shape = 's32[1]{0}', space=sflag, size = 0x4, scoped, tag = 'scoped memory for _run_kernel.1']
    #allocation4 [shape = 's32[1]{0}', space=sflag, size = 0x4, scoped, tag = 'scoped memory for _run_kernel.1']
    #allocation5 [shape = 'u8[4096]{0}', space=vmem, size = 0x1000, scoped, tag = 'input window, operand 1, single buffered']
    #allocation6 [shape = 's32[1]{0}', space=sflag, size = 0x4, scoped, tag = 'scoped memory for _run_kernel.1']
    #allocation7 [shape = 'u8[77824]{0}', space=vmem, size = 0x13000, scoped, tag = 'input window, operand 2, single buffered']
    #allocation8 [shape = 'u8[4096]{0}', space=vmem, size = 0x1000, scoped, tag = 'output window, operand 0, single buffered']
    %8 = vsyncpa [#allocation3], 0
    %9 = vsyncpa [#allocation6], 0
    %10 = vsyncpa [#allocation4], 0
    // Predicated region
    $region2: #{_run_kernel.1} parent=1 // pred_check
      _
    $region3: #{_run_kernel.1} parent=1 // pred_check_branch
      %12 = sbr.rel (0) target = $region5
    $region4: #{_run_kernel.1} parent=1 // pred_region
      %s14 = ssub.s32 128, 128
      %15 = vsyncadd [#allocation3], %s14
      %s17 = sshll.u32 [#allocation2], 4
      %s18 = int_to_ptr.vmem [resolvable:$true] %s17
      %20 = dma.hbm_to_vmem [thread:$0]  %s0, 128, %s18, [#allocation3]
    $region5: #{_run_kernel.1} parent=1 // pred_fallthru
      _
    // Predicated region
    $region6: #{_run_kernel.1} parent=1 // pred_check
      _
    $region7: #{_run_kernel.1} parent=1 // pred_check_branch
      %22 = sbr.rel (0) target = $region9
    $region8: #{_run_kernel.1} parent=1 // pred_region
      %s24 = ssub.s32 128, 128
      %25 = vsyncadd [#allocation6], %s24
      %s27 = sshll.u32 [#allocation5], 4
      %s28 = int_to_ptr.vmem [resolvable:$true] %s27
      %30 = dma.hbm_to_vmem [thread:$0]  %s1, 128, %s28, [#allocation6]
    $region9: #{_run_kernel.1} parent=1 // pred_fallthru
      _
    // Predicated region
    $region10: #{_run_kernel.1} parent=1 // pred_check
      _
    $region11: #{_run_kernel.1} parent=1 // pred_check_branch
      %32 = sbr.rel (0) target = $region13
    $region12: #{_run_kernel.1} parent=1 // pred_region
      %s34 = ssub.s32 2432, 2432
      %35 = vsyncadd [#allocation6], %s34
      %s36 = sshll.u32 [#allocation7], 4
      %s37 = int_to_ptr.vmem [resolvable:$true] %s36
      %42 = dma.hbm_to_vmem [thread:$0]  %s2, 2432, %s37, [#allocation6], 128, 128, 8
    $region13: #{_run_kernel.1} parent=1 // pred_fallthru
      _
    // Predicated region
    $region14: #{_run_kernel.1} parent=1 // pred_check
      _
    $region15: #{_run_kernel.1} parent=1 // pred_check_branch
      %44 = sbr.rel (0) target = $region17
    $region16: #{_run_kernel.1} parent=1 // pred_region
      %45 = dma.done [#allocation3], 128
    $region17: #{_run_kernel.1} parent=1 // pred_fallthru
      _
    // Predicated region
    $region18: #{_run_kernel.1} parent=1 // pred_check
      _
    $region19: #{_run_kernel.1} parent=1 // pred_check_branch
      %47 = sbr.rel (0) target = $region21
    $region20: #{_run_kernel.1} parent=1 // pred_region
      %48 = dma.done [#allocation6], 128
    $region21: #{_run_kernel.1} parent=1 // pred_fallthru
      _
    // Predicated region
    $region22: #{_run_kernel.1} parent=1 // pred_check
      _
    $region23: #{_run_kernel.1} parent=1 // pred_check_branch
      %50 = sbr.rel (0) target = $region25
    $region24: #{_run_kernel.1} parent=1 // pred_region
      %51 = dma.done [#allocation6], 2432
    $region25: #{_run_kernel.1} parent=1 // pred_fallthru
      _
    %v53 = vld [vmem:[#allocation2] sm:$0xff]
    %v54 = vpack.c.bf16 %v53, %v53
    %v55 = vld [vmem:[#allocation5] sm:$0xff]
    %v56 = vld [vmem:[#allocation7] sm:$0xff]
    %v57 = vld [vmem:[#allocation7 + $0x8] sm:$0xff]
    %v58 = vpack.c.bf16 %v57, %v56
    %vm59 = vcmask 130048
    %v61 = vsel %vm59, %v54, 0
    %63 = vmatprep.subr.bf16.mxu0 0
    %64 = vmatpush1.bf16.msra.mxu0 0
    %65 = vmatprep.subr.bf16.mxu0 0
    %66 = vmatpush1.bf16.msra.mxu0 0
    %67 = vmatprep.subr.bf16.mxu0 0
    %68 = vmatpush1.bf16.msra.mxu0 0
    %69 = vmatprep.subr.bf16.mxu0 0
    %70 = vmatpush1.bf16.msra.mxu0 0
    %71 = vmatprep.subr.bf16.mxu0 0
    %72 = vmatpush1.bf16.msra.mxu0 0
    %73 = vmatprep.subr.bf16.mxu0 0
    %74 = vmatpush1.bf16.msra.mxu0 0
    %75 = vmatprep.subr.bf16.mxu0 0
    %76 = vmatpush1.bf16.msra.mxu0 0
    %77 = vmatprep.subr.bf16.mxu0 0
    %78 = vmatpush1.bf16.msra.mxu0 %v58
    %79 = vmatprep.subr.bf16.mxu0 0
    %80 = vmatpush2.bf16.msra.mxu0 0
    %81 = vmatprep.subr.bf16.mxu0 0
    %82 = vmatpush2.bf16.msra.mxu0 0
    %83 = vmatprep.subr.bf16.mxu0 0
    %84 = vmatpush2.bf16.msra.mxu0 0
    %85 = vmatprep.subr.bf16.mxu0 0
    %86 = vmatpush2.bf16.msra.mxu0 0
    %87 = vmatprep.subr.bf16.mxu0 0
    %88 = vmatpush2.bf16.msra.mxu0 0
    %89 = vmatprep.subr.bf16.mxu0 0
    %90 = vmatpush2.bf16.msra.mxu0 0
    %91 = vmatprep.subr.bf16.mxu0 0
    %92 = vmatpush2.bf16.msra.mxu0 0
    %93 = vmatprep.subr.bf16.mxu0 0
    %94 = vmatpush2.bf16.msra.mxu0 0
    %95 = vmatprep.mubr.bf16.mxu0 0
    %96 = vmatmul.mubr.bf16.gmra.mxu0 %v61
    %v97 = vpop.f32.mrf.mxu0
    %v98 = vadd.f32 0.0, %v97
    %v99 = vpop.f32.mrf.mxu0
    %v100 = vpop.f32.mrf.mxu0
    %v101 = vpop.f32.mrf.mxu0
    %102 = vdwg.mxu0
    %v103 = vld [vmem:[#allocation7 + $0x10] sm:$0x3]
    %v104 = vpack.c.bf16 %v103, %v103
    %v106 = vsel %vm59, %v104, 0
    %108 = vmatprep.subr.bf16.mxu0 0
    %109 = vmatpush1.bf16.xpose.msra.mxu0 0
    %110 = vmatprep.subr.bf16.mxu0 0
    %111 = vmatpush1.bf16.xpose.msra.mxu0 0
    %112 = vmatprep.subr.bf16.mxu0 0
    %113 = vmatpush1.bf16.xpose.msra.mxu0 0
    %114 = vmatprep.subr.bf16.mxu0 0
    %115 = vmatpush1.bf16.xpose.msra.mxu0 0
    %116 = vmatprep.subr.bf16.mxu0 0
    %117 = vmatpush1.bf16.xpose.msra.mxu0 0
    %118 = vmatprep.subr.bf16.mxu0 0
    %119 = vmatpush1.bf16.xpose.msra.mxu0 0
    %120 = vmatprep.subr.bf16.mxu0 0
    %121 = vmatpush1.bf16.xpose.msra.mxu0 0
    %122 = vmatprep.subr.bf16.mxu0 0
    %123 = vmatpush1.bf16.xpose.msra.mxu0 %v61
    %124 = vmatprep.subr.bf16.mxu0 0
    %125 = vmatpush2.bf16.xpose.msra.mxu0 0
    %126 = vmatprep.subr.bf16.mxu0 0
    %127 = vmatpush2.bf16.xpose.msra.mxu0 0
    %128 = vmatprep.subr.bf16.mxu0 0
    %129 = vmatpush2.bf16.xpose.msra.mxu0 0
    %130 = vmatprep.subr.bf16.mxu0 0
    %131 = vmatpush2.bf16.xpose.msra.mxu0 0
    %132 = vmatprep.subr.bf16.mxu0 0
    %133 = vmatpush2.bf16.xpose.msra.mxu0 0
    %134 = vmatprep.subr.bf16.mxu0 0
    %135 = vmatpush2.bf16.xpose.msra.mxu0 0
    %136 = vmatprep.subr.bf16.mxu0 0
    %137 = vmatpush2.bf16.xpose.msra.mxu0 0
    %138 = vmatprep.subr.bf16.mxu0 0
    %139 = vmatpush2.bf16.xpose.msra.mxu0 0
    %140 = vmatprep.mubr.bf16.mxu0 0
    %141 = vmatmul.mubr.bf16.gmra.mxu0 %v106
    %v142 = vpop.f32.mrf.mxu0
    %v143 = vadd.f32 0.0, %v142
    %v144 = vpop.f32.mrf.mxu0
    %v145 = vpop.f32.mrf.mxu0
    %v146 = vpop.f32.mrf.mxu0
    %147 = vdwg.mxu0
    %v148 = vpack.c.bf16 %v98, %v98
    %150 = vset.pattern.permute.xlu0 64
    %151 = vperm.xlu0 %150, %v98
    %v152 = vpop.permute.xlu0 %151
    %v154 = vlaneseq
    %v155 = vshrl.u32 %v154, 7
    %v156 = vsub.s32 0, %v155
    %v157 = vrot.slane %v143, %v156
    %v158 = vadd.f32 %v152, %v157
    %vm159 = vcmp.gt.f32.partialorder %v158, 0.0
    %v160 = vmul.f32 %v158, 0.2
    %v161 = vsel %vm159, %v158, %v160
    %v162 = vadd.f32 %v161, %v55
    %vm163 = vcmask 64512
    %v164 = vsel %vm163, %v162, -inf
    %165 = vmax.xlane.f32.xlu0 %v164
    %v166 = vpop.xlane.xlu0 %165
    %v167 = vsub.f32 %v162, %v166
    %v168 = vmul.f32 %v167, 1.442695
    %v169 = vpow.pop %v168
    %v170 = vsel %vm163, %v169, 0.0
    %171 = vadd.xlane.f32.xlu0 %v170
    %v172 = vpop.xlane.xlu0 %171
    %v173 = vrcp.pop %v172
    %v174 = vmul.f32 %v169, %v173
    %v175 = vpack.c.bf16 %v174, %v174
    %v177 = vsel %vm163, %v175, 0
    %vm179 = vcmask 1043456
    %v181 = vsel %vm179, %v148, 0
    %183 = vmatprep.subr.bf16.mxu0 0
    %184 = vmatpush1.bf16.msra.mxu0 0
    %185 = vmatprep.subr.bf16.mxu0 0
    %186 = vmatpush1.bf16.msra.mxu0 0
    %187 = vmatprep.subr.bf16.mxu0 0
    %188 = vmatpush1.bf16.msra.mxu0 0
    %189 = vmatprep.subr.bf16.mxu0 0
    %190 = vmatpush1.bf16.msra.mxu0 0
    %191 = vmatprep.subr.bf16.mxu0 0
    %192 = vmatpush1.bf16.msra.mxu0 0
    %193 = vmatprep.subr.bf16.mxu0 0
    %194 = vmatpush1.bf16.msra.mxu0 0
    %195 = vmatprep.subr.bf16.mxu0 0
    %196 = vmatpush1.bf16.msra.mxu0 0
    %197 = vmatprep.subr.bf16.mxu0 0
    %198 = vmatpush1.bf16.msra.mxu0 %v181
    %199 = vmatprep.subr.bf16.mxu0 0
    %200 = vmatpush2.bf16.msra.mxu0 0
    %201 = vmatprep.subr.bf16.mxu0 0
    %202 = vmatpush2.bf16.msra.mxu0 0
    %203 = vmatprep.subr.bf16.mxu0 0
    %204 = vmatpush2.bf16.msra.mxu0 0
    %205 = vmatprep.subr.bf16.mxu0 0
    %206 = vmatpush2.bf16.msra.mxu0 0
    %207 = vmatprep.subr.bf16.mxu0 0
    %208 = vmatpush2.bf16.msra.mxu0 0
    %209 = vmatprep.subr.bf16.mxu0 0
    %210 = vmatpush2.bf16.msra.mxu0 0
    %211 = vmatprep.subr.bf16.mxu0 0
    %212 = vmatpush2.bf16.msra.mxu0 0
    %213 = vmatprep.subr.bf16.mxu0 0
    %214 = vmatpush2.bf16.msra.mxu0 0
    %215 = vmatprep.mubr.bf16.mxu0 0
    %216 = vmatmul.mubr.bf16.gmra.mxu0 %v177
    %v217 = vpop.f32.mrf.mxu0
    %v218 = vadd.f32 0.0, %v217
    %v219 = vpop.f32.mrf.mxu0
    %v220 = vpop.f32.mrf.mxu0
    %v221 = vpop.f32.mrf.mxu0
    %222 = vdwg.mxu0
    %223 = vset.pattern.permute.xlu0 65
    %224 = vperm.xlu0 %223, %v98
    %v225 = vpop.permute.xlu0 %224
    %v227 = vlaneseq
    %v228 = vshrl.u32 %v227, 7
    %v229 = vsub.s32 1, %v228
    %v230 = vrot.slane %v143, %v229
    %v231 = vadd.f32 %v225, %v230
    %vm232 = vcmp.gt.f32.partialorder %v231, 0.0
    %v233 = vmul.f32 %v231, 0.2
    %v234 = vsel %vm232, %v231, %v233
    %v235 = vadd.f32 %v234, %v55
    %v236 = vsel %vm163, %v235, -inf
    %237 = vmax.xlane.f32.xlu0 %v236
    %v238 = vpop.xlane.xlu0 %237
    %v239 = vsub.f32 %v235, %v238
    %v240 = vmul.f32 %v239, 1.442695
    %v241 = vpow.pop %v240
    %v242 = vsel %vm163, %v241, 0.0
    %243 = vadd.xlane.f32.xlu0 %v242
    %v244 = vpop.xlane.xlu0 %243
    %v245 = vrcp.pop %v244
    %v246 = vmul.f32 %v241, %v245
    %v247 = vpack.c.bf16 %v246, %v246
    %249 = vrot.lane.b32.xlu0 %v148, 96
    %v250 = vpop.permute.xlu0 %249
    %v252 = vsel %vm163, %v247, 0
    %v255 = vsel %vm179, %v250, 0
    %257 = vmatprep.subr.bf16.mxu0 0
    %258 = vmatpush1.bf16.msra.mxu0 0
    %259 = vmatprep.subr.bf16.mxu0 0
    %260 = vmatpush1.bf16.msra.mxu0 0
    %261 = vmatprep.subr.bf16.mxu0 0
    %262 = vmatpush1.bf16.msra.mxu0 0
    %263 = vmatprep.subr.bf16.mxu0 0
    %264 = vmatpush1.bf16.msra.mxu0 0
    %265 = vmatprep.subr.bf16.mxu0 0
    %266 = vmatpush1.bf16.msra.mxu0 0
    %267 = vmatprep.subr.bf16.mxu0 0
    %268 = vmatpush1.bf16.msra.mxu0 0
    %269 = vmatprep.subr.bf16.mxu0 0
    %270 = vmatpush1.bf16.msra.mxu0 0
    %271 = vmatprep.subr.bf16.mxu0 0
    %272 = vmatpush1.bf16.msra.mxu0 %v255
    %273 = vmatprep.subr.bf16.mxu0 0
    %274 = vmatpush2.bf16.msra.mxu0 0
    %275 = vmatprep.subr.bf16.mxu0 0
    %276 = vmatpush2.bf16.msra.mxu0 0
    %277 = vmatprep.subr.bf16.mxu0 0
    %278 = vmatpush2.bf16.msra.mxu0 0
    %279 = vmatprep.subr.bf16.mxu0 0
    %280 = vmatpush2.bf16.msra.mxu0 0
    %281 = vmatprep.subr.bf16.mxu0 0
    %282 = vmatpush2.bf16.msra.mxu0 0
    %283 = vmatprep.subr.bf16.mxu0 0
    %284 = vmatpush2.bf16.msra.mxu0 0
    %285 = vmatprep.subr.bf16.mxu0 0
    %286 = vmatpush2.bf16.msra.mxu0 0
    %287 = vmatprep.subr.bf16.mxu0 0
    %288 = vmatpush2.bf16.msra.mxu0 0
    %289 = vmatprep.mubr.bf16.mxu0 0
    %290 = vmatmul.mubr.bf16.gmra.mxu0 %v252
    %v291 = vpop.f32.mrf.mxu0
    %v292 = vadd.f32 0.0, %v291
    %v293 = vpop.f32.mrf.mxu0
    %v294 = vpop.f32.mrf.mxu0
    %v295 = vpop.f32.mrf.mxu0
    %296 = vdwg.mxu0
    %v297 = vld [vmem:[#allocation7 + $0x18] sm:$0x1]
    %299 = vrot.lane.b32.xlu0 %v292, 32
    %v300 = vpop.permute.xlu0 %299
    %vm302 = vcmask 261120
    %v303 = vsel %vm302, %v218, %v300
    %v304 = vlaneseq
    %v305 = vshrl.u32 %v304, 7
    %v306 = vsub.s32 0, %v305
    %v307 = vrot.slane %v297, %v306
    %v308 = vadd.f32 %v303, %v307
    %vm309 = vcmp.gt.f32.partialorder %v308, 0.0
    %v310 = vmul.f32 %v308, 1.442695
    %v311 = vpow.pop %v310
    %v312 = vsub.f32 %v311, 1.0
    %v313 = vsel %vm309, %v308, %v312
    %v314 = vpack.c.bf16 %v313, %v313
    %v315 = vld [vmem:[#allocation7 + $0x20] sm:$0xff]
    %v316 = vld [vmem:[#allocation7 + $0x28] sm:$0xff]
    %v317 = vld [vmem:[#allocation7 + $0x30] sm:$0xff]
    %v318 = vld [vmem:[#allocation7 + $0x38] sm:$0xff]
    %v319 = vld [vmem:[#allocation7 + $0x40] sm:$0xff]
    %v320 = vld [vmem:[#allocation7 + $0x48] sm:$0xff]
    %v321 = vld [vmem:[#allocation7 + $0x50] sm:$0xff]
    %v322 = vld [vmem:[#allocation7 + $0x58] sm:$0xff]
    %v323 = vpack.c.bf16 %v316, %v315
    %v324 = vpack.c.bf16 %v318, %v317
    %v325 = vpack.c.bf16 %v320, %v319
    %v326 = vpack.c.bf16 %v322, %v321
    %vm327 = vcmask 523264
    %v329 = vsel %vm327, %v314, 0
    %331 = vmatprep.subr.bf16.mxu0 0
    %332 = vmatpush1.bf16.msra.mxu0 0
    %333 = vmatprep.subr.bf16.mxu0 0
    %334 = vmatpush1.bf16.msra.mxu0 0
    %335 = vmatprep.subr.bf16.mxu0 0
    %336 = vmatpush1.bf16.msra.mxu0 0
    %337 = vmatprep.subr.bf16.mxu0 0
    %338 = vmatpush1.bf16.msra.mxu0 0
    %339 = vmatprep.subr.bf16.mxu0 0
    %340 = vmatpush1.bf16.msra.mxu0 %v326
    %341 = vmatprep.subr.bf16.mxu0 0
    %342 = vmatpush1.bf16.msra.mxu0 %v325
    %343 = vmatprep.subr.bf16.mxu0 0
    %344 = vmatpush1.bf16.msra.mxu0 %v324
    %345 = vmatprep.subr.bf16.mxu0 0
    %346 = vmatpush1.bf16.msra.mxu0 %v323
    %347 = vmatprep.subr.bf16.mxu0 0
    %348 = vmatpush2.bf16.msra.mxu0 0
    %349 = vmatprep.subr.bf16.mxu0 0
    %350 = vmatpush2.bf16.msra.mxu0 0
    %351 = vmatprep.subr.bf16.mxu0 0
    %352 = vmatpush2.bf16.msra.mxu0 0
    %353 = vmatprep.subr.bf16.mxu0 0
    %354 = vmatpush2.bf16.msra.mxu0 0
    %355 = vmatprep.subr.bf16.mxu0 0
    %356 = vmatpush2.bf16.msra.mxu0 0
    %357 = vmatprep.subr.bf16.mxu0 0
    %358 = vmatpush2.bf16.msra.mxu0 0
    %359 = vmatprep.subr.bf16.mxu0 0
    %360 = vmatpush2.bf16.msra.mxu0 0
    %361 = vmatprep.subr.bf16.mxu0 0
    %362 = vmatpush2.bf16.msra.mxu0 0
    %363 = vmatprep.mubr.bf16.mxu0 0
    %364 = vmatmul.mubr.bf16.gmra.mxu0 %v329
    %v365 = vpop.f32.mrf.mxu0
    %v366 = vadd.f32 0.0, %v365
    %v367 = vpop.f32.mrf.mxu0
    %v368 = vpop.f32.mrf.mxu0
    %v369 = vpop.f32.mrf.mxu0
    %370 = vdwg.mxu0
    %v371 = vld [vmem:[#allocation7 + $0x60] sm:$0x1]
    %v372 = vpack.c.bf16 %v371, %v371
    %v374 = vsel %vm327, %v372, 0
    %376 = vmatprep.subr.bf16.mxu0 0
    %377 = vmatpush1.bf16.xpose.msra.mxu0 0
    %378 = vmatprep.subr.bf16.mxu0 0
    %379 = vmatpush1.bf16.xpose.msra.mxu0 0
    %380 = vmatprep.subr.bf16.mxu0 0
    %381 = vmatpush1.bf16.xpose.msra.mxu0 0
    %382 = vmatprep.subr.bf16.mxu0 0
    %383 = vmatpush1.bf16.xpose.msra.mxu0 0
    %384 = vmatprep.subr.bf16.mxu0 0
    %385 = vmatpush1.bf16.xpose.msra.mxu0 0
    %386 = vmatprep.subr.bf16.mxu0 0
    %387 = vmatpush1.bf16.xpose.msra.mxu0 0
    %388 = vmatprep.subr.bf16.mxu0 0
    %389 = vmatpush1.bf16.xpose.msra.mxu0 0
    %390 = vmatprep.subr.bf16.mxu0 0
    %391 = vmatpush1.bf16.xpose.msra.mxu0 %v329
    %392 = vmatprep.subr.bf16.mxu0 0
    %393 = vmatpush2.bf16.xpose.msra.mxu0 0
    %394 = vmatprep.subr.bf16.mxu0 0
    %395 = vmatpush2.bf16.xpose.msra.mxu0 0
    %396 = vmatprep.subr.bf16.mxu0 0
    %397 = vmatpush2.bf16.xpose.msra.mxu0 0
    %398 = vmatprep.subr.bf16.mxu0 0
    %399 = vmatpush2.bf16.xpose.msra.mxu0 0
    %400 = vmatprep.subr.bf16.mxu0 0
    %401 = vmatpush2.bf16.xpose.msra.mxu0 0
    %402 = vmatprep.subr.bf16.mxu0 0
    %403 = vmatpush2.bf16.xpose.msra.mxu0 0
    %404 = vmatprep.subr.bf16.mxu0 0
    %405 = vmatpush2.bf16.xpose.msra.mxu0 0
    %406 = vmatprep.subr.bf16.mxu0 0
    %407 = vmatpush2.bf16.xpose.msra.mxu0 0
    %408 = vmatprep.mubr.bf16.mxu0 0
    %409 = vmatmul.mubr.bf16.gmra.mxu0 %v374
    %v410 = vpop.f32.mrf.mxu0
    %v411 = vadd.f32 0.0, %v410
    %v412 = vpop.f32.mrf.mxu0
    %v413 = vpop.f32.mrf.mxu0
    %v414 = vpop.f32.mrf.mxu0
    %415 = vdwg.mxu0
    %v416 = vpack.c.bf16 %v366, %v366
    %418 = vset.pattern.permute.xlu0 32
    %419 = vperm.xlu0 %418, %v366
    %v420 = vpop.permute.xlu0 %419
    %v422 = vlaneseq
    %v423 = vshrl.u32 %v422, 7
    %v424 = vsub.s32 0, %v423
    %v425 = vrot.slane %v411, %v424
    %v426 = vadd.f32 %v420, %v425
    %vm427 = vcmp.gt.f32.partialorder %v426, 0.0
    %v428 = vmul.f32 %v426, 0.2
    %v429 = vsel %vm427, %v426, %v428
    %v430 = vadd.f32 %v429, %v55
    %v431 = vsel %vm163, %v430, -inf
    %432 = vmax.xlane.f32.xlu0 %v431
    %v433 = vpop.xlane.xlu0 %432
    %v434 = vsub.f32 %v430, %v433
    %v435 = vmul.f32 %v434, 1.442695
    %v436 = vpow.pop %v435
    %v437 = vsel %vm163, %v436, 0.0
    %438 = vadd.xlane.f32.xlu0 %v437
    %v439 = vpop.xlane.xlu0 %438
    %v440 = vrcp.pop %v439
    %v441 = vmul.f32 %v436, %v440
    %v442 = vpack.c.bf16 %v441, %v441
    %v443 = vld [vmem:[#allocation7 + $0x68] sm:$0x1]
    %v444 = vlaneseq
    %v445 = vshrl.u32 %v444, 7
    %v446 = vsub.s32 0, %v445
    %v447 = vrot.slane %v443, %v446
    %v449 = vsel %vm163, %v442, 0
    %v452 = vsel %vm179, %v416, 0
    %454 = vmatprep.subr.bf16.mxu0 0
    %455 = vmatpush1.bf16.msra.mxu0 0
    %456 = vmatprep.subr.bf16.mxu0 0
    %457 = vmatpush1.bf16.msra.mxu0 0
    %458 = vmatprep.subr.bf16.mxu0 0
    %459 = vmatpush1.bf16.msra.mxu0 0
    %460 = vmatprep.subr.bf16.mxu0 0
    %461 = vmatpush1.bf16.msra.mxu0 0
    %462 = vmatprep.subr.bf16.mxu0 0
    %463 = vmatpush1.bf16.msra.mxu0 0
    %464 = vmatprep.subr.bf16.mxu0 0
    %465 = vmatpush1.bf16.msra.mxu0 0
    %466 = vmatprep.subr.bf16.mxu0 0
    %467 = vmatpush1.bf16.msra.mxu0 0
    %468 = vmatprep.subr.bf16.mxu0 0
    %469 = vmatpush1.bf16.msra.mxu0 %v452
    %470 = vmatprep.subr.bf16.mxu0 0
    %471 = vmatpush2.bf16.msra.mxu0 0
    %472 = vmatprep.subr.bf16.mxu0 0
    %473 = vmatpush2.bf16.msra.mxu0 0
    %474 = vmatprep.subr.bf16.mxu0 0
    %475 = vmatpush2.bf16.msra.mxu0 0
    %476 = vmatprep.subr.bf16.mxu0 0
    %477 = vmatpush2.bf16.msra.mxu0 0
    %478 = vmatprep.subr.bf16.mxu0 0
    %479 = vmatpush2.bf16.msra.mxu0 0
    %480 = vmatprep.subr.bf16.mxu0 0
    %481 = vmatpush2.bf16.msra.mxu0 0
    %482 = vmatprep.subr.bf16.mxu0 0
    %483 = vmatpush2.bf16.msra.mxu0 0
    %484 = vmatprep.subr.bf16.mxu0 0
    %485 = vmatpush2.bf16.msra.mxu0 0
    %486 = vmatprep.mubr.bf16.mxu0 0
    %487 = vmatmul.mubr.bf16.gmra.mxu0 %v449
    %v488 = vpop.f32.mrf.mxu0
    %v489 = vadd.f32 %v447, %v488
    %v490 = vpop.f32.mrf.mxu0
    %v491 = vpop.f32.mrf.mxu0
    %v492 = vpop.f32.mrf.mxu0
    %493 = vdwg.mxu0
    %v494 = vld [vmem:[#allocation7 + $0x70] sm:$0xff]
    %v495 = vld [vmem:[#allocation7 + $0x78] sm:$0xff]
    %v496 = vld [vmem:[#allocation7 + $0x80] sm:$0xff]
    %v497 = vld [vmem:[#allocation7 + $0x88] sm:$0xff]
    %v498 = vpack.c.bf16 %v495, %v494
    %v499 = vpack.c.bf16 %v497, %v496
    %v500 = vpack.c.bf16 %v489, %v489
    %v501 = vld [vmem:[#allocation7 + $0x90] sm:$0x1]
    %v502 = vlaneseq
    %v503 = vshrl.u32 %v502, 7
    %v504 = vsub.s32 0, %v503
    %v505 = vrot.slane %v501, %v504
    %v507 = vsel %vm302, %v500, 0
    %509 = vmatprep.subr.bf16.mxu0 0
    %510 = vmatpush1.bf16.msra.mxu0 0
    %511 = vmatprep.subr.bf16.mxu0 0
    %512 = vmatpush1.bf16.msra.mxu0 0
    %513 = vmatprep.subr.bf16.mxu0 0
    %514 = vmatpush1.bf16.msra.mxu0 0
    %515 = vmatprep.subr.bf16.mxu0 0
    %516 = vmatpush1.bf16.msra.mxu0 0
    %517 = vmatprep.subr.bf16.mxu0 0
    %518 = vmatpush1.bf16.msra.mxu0 0
    %519 = vmatprep.subr.bf16.mxu0 0
    %520 = vmatpush1.bf16.msra.mxu0 0
    %521 = vmatprep.subr.bf16.mxu0 0
    %522 = vmatpush1.bf16.msra.mxu0 %v499
    %523 = vmatprep.subr.bf16.mxu0 0
    %524 = vmatpush1.bf16.msra.mxu0 %v498
    %525 = vmatprep.subr.bf16.mxu0 0
    %526 = vmatpush2.bf16.msra.mxu0 0
    %527 = vmatprep.subr.bf16.mxu0 0
    %528 = vmatpush2.bf16.msra.mxu0 0
    %529 = vmatprep.subr.bf16.mxu0 0
    %530 = vmatpush2.bf16.msra.mxu0 0
    %531 = vmatprep.subr.bf16.mxu0 0
    %532 = vmatpush2.bf16.msra.mxu0 0
    %533 = vmatprep.subr.bf16.mxu0 0
    %534 = vmatpush2.bf16.msra.mxu0 0
    %535 = vmatprep.subr.bf16.mxu0 0
    %536 = vmatpush2.bf16.msra.mxu0 0
    %537 = vmatprep.subr.bf16.mxu0 0
    %538 = vmatpush2.bf16.msra.mxu0 0
    %539 = vmatprep.subr.bf16.mxu0 0
    %540 = vmatpush2.bf16.msra.mxu0 0
    %541 = vmatprep.mubr.bf16.mxu0 0
    %542 = vmatmul.mubr.bf16.gmra.mxu0 %v507
    %v543 = vpop.f32.mrf.mxu0
    %v544 = vadd.f32 %v505, %v543
    %v545 = vpop.f32.mrf.mxu0
    %v546 = vpop.f32.mrf.mxu0
    %v547 = vpop.f32.mrf.mxu0
    %548 = vdwg.mxu0
    %549 = vst.msk [vmem:[#allocation8] sm:$0xff] %vm327, %v544
    // Predicated region
    $region26: #{_run_kernel.1} parent=1 // pred_check
      _
    $region27: #{_run_kernel.1} parent=1 // pred_check_branch
      %551 = sbr.rel (0) target = $region29
    $region28: #{_run_kernel.1} parent=1 // pred_region
      %s553 = ssub.s32 128, 128
      %554 = vsyncadd [#allocation4], %s553
      %s556 = sshll.u32 [#allocation8], 4
      %s557 = int_to_ptr.vmem [resolvable:$true] %s556
      %559 = dma.vmem_to_hbm [thread:$0]  %s557, 128, %s3, [#allocation4]
    $region29: #{_run_kernel.1} parent=1 // pred_fallthru
      _
    // Predicated region
    $region30: #{_run_kernel.1} parent=1 // pred_check
      _
    $region31: #{_run_kernel.1} parent=1 // pred_check_branch
      %561 = sbr.rel (0) target = $region33
    $region32: #{_run_kernel.1} parent=1 // pred_region
      %562 = dma.done [#allocation4], 128
    $region33: #{_run_kernel.1} parent=1 // pred_fallthru
      _
    %563 = vsyncpa [#allocation3], 1
    %564 = vsyncpa [#allocation6], 1
    %565 = vsyncpa [#allocation4], 1

</llo_original>
